<compile_context>
chip_gen: v6e
topology: v6e:2x2x1
jax: 0.10.0
libtpu: 0.0.40
codegen_flags: <defaults>
</compile_context>

<pallas_src>
import functools

import jax
import jax.numpy as jnp
import numpy as np
from jax import lax
from jax.experimental import pallas as pl
from jax.experimental.pallas import tpu as pltpu


def r_block_kernel(xpad_ref, w1_ref, w2_ref, bn_ref, o_ref, *,
                   H, W, Cin, P, shortcut_pad):
    Wp = W + 2                       # padded width
    L = H * Wp                       # flattened (over-computed) output length
    Lp = (H + 3) * Wp                # flattened padded-input length
    offs = [dy * Wp + dx for dy in range(3) for dx in range(3)]

    # folded BN params as (P, 1) columns (broadcast over the lane/spatial axis)
    s1 = bn_ref[:, 0:1]
    b1 = bn_ref[:, 1:2]
    s2 = bn_ref[:, 2:3]
    b2 = bn_ref[:, 3:4]

    # lane mask killing the two "wrapped" padded-width columns (x >= W)
    col = lax.broadcasted_iota(jnp.int32, (P, L), 1) % Wp
    valid = col < W

    # ---- conv1: one fat MXU contraction (P, 9*Cin) @ (9*Cin, L) -------------
    xf = xpad_ref[0].astype(jnp.float32)                        # (Cin, Lp)
    patches1 = jnp.concatenate(
        [xf[:, off:off + L] for off in offs], axis=0).astype(jnp.bfloat16)
    acc1 = jnp.dot(w1_ref[...], patches1,
                   preferred_element_type=jnp.float32)          # (P, L) f32

    # dropout1 -> identity (inference); folded bn1; ReLU; zero wrap columns
    h = jnp.maximum(acc1 * s1 + b1, 0.0)
    h = jnp.where(valid, h, 0.0)                                # (P, L)

    # ---- build zero-padded conv2 input as a value (no scratch, no zeroing) --
    zl = jnp.zeros((P, Wp + 1), jnp.float32)
    zr = jnp.zeros((P, Lp - (Wp + 1) - L), jnp.float32)
    h_pad = jnp.concatenate([zl, h, zr], axis=1)                # (P, Lp)

    # ---- conv2: one fat MXU contraction (P, 9*P) @ (9*P, L) -----------------
    patches2 = jnp.concatenate(
        [h_pad[:, off:off + L] for off in offs], axis=0).astype(jnp.bfloat16)
    acc2 = jnp.dot(w2_ref[...], patches2,
                   preferred_element_type=jnp.float32)          # (P, L) f32

    # dropout2 -> identity; folded bn2
    out = acc2 * s2 + b2

    # ---- residual from the already-resident padded input interior -----------
    res = xf[:, Wp + 1:Wp + 1 + L]                              # (Cin, L) == x
    if shortcut_pad:
        padc = Cin // 2
        z = jnp.zeros((padc, L), jnp.float32)
        res = jnp.concatenate([z, res, z], axis=0)              # (P, L)
    out = jnp.maximum(out + res, 0.0)

    o_ref[...] = out.reshape(1, P, L).astype(o_ref.dtype)


def r_block_pallas(x_nchw, w1, w2, bn1, bn2, *, shortcut_pad, eps=1e-5):
    """x_nchw: (N, Cin, H, W). w1: (P, Cin, 3, 3). w2: (P, P, 3, 3)."""
    N, Cin, H, W = x_nchw.shape
    P = w1.shape[0]
    Wp, L, Lp = W + 2, H * (W + 2), (H + 3) * (W + 2)
    # TODO(synk): stride > 1 not implemented (module default stride=1 used).
    # TODO(synk): leaky=True (LeakyReLU) variant not implemented.

    # channels-first, spatially zero-padded (1 top, 2 bottom, 1 left/right),
    # flattened over (H+3, W+2); bf16 in HBM halves the input DMA bytes.
    xpad = jnp.pad(x_nchw, ((0, 0), (0, 0), (1, 2), (1, 1)))
    xpad = xpad.reshape(N, Cin, Lp).astype(jnp.bfloat16)

    # conv weights OIHW -> (O, kH, kW, I) -> (O, 9*I), matching patch layout
    w1_k = jnp.transpose(w1, (0, 2, 3, 1)).reshape(P, 9 * Cin).astype(jnp.bfloat16)
    w2_k = jnp.transpose(w2, (0, 2, 3, 1)).reshape(P, 9 * P).astype(jnp.bfloat16)

    def fold_bn(bn):
        gamma, beta, mean, var = bn
        scale = gamma / jnp.sqrt(var + eps)
        return scale, beta - mean * scale

    s1, b1 = fold_bn(bn1)
    s2, b2 = fold_bn(bn2)
    bn_pack = jnp.stack([s1, b1, s2, b2], axis=1).astype(jnp.float32)  # (P, 4)

    kernel = functools.partial(r_block_kernel, H=H, W=W, Cin=Cin, P=P,
                               shortcut_pad=shortcut_pad)

    out_flat = pl.pallas_call(
        kernel,
        out_shape=jax.ShapeDtypeStruct((N, P, L), x_nchw.dtype),
        grid_spec=pltpu.PrefetchScalarGridSpec(
            num_scalar_prefetch=0,
            grid=(N,),
            in_specs=[
                pl.BlockSpec((1, Cin, Lp), lambda n: (n, 0, 0)),
                pl.BlockSpec((P, 9 * Cin), lambda n: (0, 0)),
                pl.BlockSpec((P, 9 * P), lambda n: (0, 0)),
                pl.BlockSpec((P, 4), lambda n: (0, 0)),
            ],
            out_specs=pl.BlockSpec((1, P, L), lambda n: (n, 0, 0)),
        ),
        compiler_params=pltpu.CompilerParams(
            dimension_semantics=("parallel",)),
    )(xpad, w1_k, w2_k, bn_pack)

    # drop the two wrapped padded-width columns; result is already NCHW
    return out_flat.reshape(N, P, H, Wp)[:, :, :, :W]


# ---------------- pure-JAX reference (NCHW, mirrors the PyTorch module) ------
def r_block_ref(x, w1, w2, bn1, bn2, *, shortcut_pad, eps=1e-5):
    def conv(inp, w):
        return lax.conv_general_dilated(
            inp, w, window_strides=(1, 1), padding=((1, 1), (1, 1)),
            dimension_numbers=("NCHW", "OIHW", "NCHW"))

    def bn(inp, params):
        gamma, beta, mean, var = [p.reshape(1, -1, 1, 1) for p in params]
        return (inp - mean) / jnp.sqrt(var + eps) * gamma + beta

    out = jax.nn.relu(bn(conv(x, w1), bn1))
    out = bn(conv(out, w2), bn2)
    identity = x
    if shortcut_pad:
        padc = x.shape[1] // 2
        identity = jnp.pad(x, ((0, 0), (padc, padc), (0, 0), (0, 0)))
    return jax.nn.relu(out + identity)


if __name__ == "__main__":
    N, Cin, H, W = 2, 4, 16, 16
    P = 2 * Cin            # shortcut_conv=True requires planes == 2 * inplanes
    shortcut_pad = True

    key = jax.random.PRNGKey(0)
    k1, k2, k3, k4, k5, k6, k7, k8, kx = jax.random.split(key, 9)

    x = jax.random.normal(kx, (N, Cin, H, W), jnp.float32)
    w1 = jax.random.normal(k1, (P, Cin, 3, 3), jnp.float32) * 0.2
    w2 = jax.random.normal(k2, (P, P, 3, 3), jnp.float32) * 0.2
    bn1 = (1.0 + 0.1 * jax.random.normal(k3, (P,), jnp.float32),    # gamma
           0.1 * jax.random.normal(k4, (P,), jnp.float32),          # beta
           0.1 * jax.random.normal(k5, (P,), jnp.float32),          # running_mean
           0.5 + jnp.abs(jax.random.normal(k6, (P,), jnp.float32)))  # running_var
    bn2 = (1.0 + 0.1 * jax.random.normal(k7, (P,), jnp.float32),
           0.1 * jax.random.normal(k8, (P,), jnp.float32),
           0.05 * jnp.ones((P,), jnp.float32),
           0.8 * jnp.ones((P,), jnp.float32))

    out = r_block_pallas(x, w1, w2, bn1, bn2, shortcut_pad=shortcut_pad)
    out = jax.block_until_ready(out)

    ref = r_block_ref(x, w1, w2, bn1, bn2, shortcut_pad=shortcut_pad)
    # bf16 MXU operands with f32 accumulation -> loosened tolerance
    np.testing.assert_allclose(np.asarray(out), np.asarray(ref),
                               rtol=5e-2, atol=5e-2)
    print("KERNEL_OK")
</pallas_src>

<mosaic_0001>
module attributes {stable_mosaic.version = 11 : i64} {
  func.func @r_block_kernel(%arg0: i32, %arg1: memref<1x4x342xbf16, #tpu.memory_space<vmem>>, %arg2: memref<8x36xbf16, #tpu.memory_space<vmem>>, %arg3: memref<8x72xbf16, #tpu.memory_space<vmem>>, %arg4: memref<8x4xf32, #tpu.memory_space<vmem>>, %arg5: memref<1x8x288xf32, #tpu.memory_space<vmem>>) attributes {dimension_semantics = [#tpu.dimension_semantics<parallel>], iteration_bounds = array<i64: 2>, scalar_prefetch = 0 : i64, scratch_operands = 0 : i64, tpu.core_type = #tpu.core_type<tc>, window_params = [{transform_indices = @transform_0, window_bounds = array<i64: 1, 4, 342>}, {pipeline_mode = #tpu.pipeline_mode<synchronous>, transform_indices = @transform_1, window_bounds = array<i64: 8, 36>}, {pipeline_mode = #tpu.pipeline_mode<synchronous>, transform_indices = @transform_2, window_bounds = array<i64: 8, 72>}, {pipeline_mode = #tpu.pipeline_mode<synchronous>, transform_indices = @transform_3, window_bounds = array<i64: 8, 4>}, {transform_indices = @transform_4, window_bounds = array<i64: 1, 8, 288>}]} {
    %c0 = arith.constant 0 : index
    %c0_0 = arith.constant 0 : index
    %0 = vector.load %arg4[%c0, %c0_0] : memref<8x4xf32, #tpu.memory_space<vmem>>, vector<8x1xf32>
    %c0_1 = arith.constant 0 : index
    %c1 = arith.constant 1 : index
    %1 = vector.load %arg4[%c0_1, %c1] : memref<8x4xf32, #tpu.memory_space<vmem>>, vector<8x1xf32>
    %c0_2 = arith.constant 0 : index
    %c2 = arith.constant 2 : index
    %2 = vector.load %arg4[%c0_2, %c2] : memref<8x4xf32, #tpu.memory_space<vmem>>, vector<8x1xf32>
    %c0_3 = arith.constant 0 : index
    %c3 = arith.constant 3 : index
    %3 = vector.load %arg4[%c0_3, %c3] : memref<8x4xf32, #tpu.memory_space<vmem>>, vector<8x1xf32>
    %4 = tpu.iota {dimensions = array<i32: 1>} : vector<8x288xi32>
    %c18_i32 = arith.constant 18 : i32
    %c0_i32 = arith.constant 0 : i32
    %5 = arith.cmpi eq, %c18_i32, %c0_i32 : i32
    %c1_i32 = arith.constant 1 : i32
    %6 = arith.select %5, %c1_i32, %c18_i32 : i32
    %7 = vector.broadcast %6 : i32 to vector<8x288xi32>
    %8 = arith.remsi %4, %7 : vector<8x288xi32>
    %c0_i32_4 = arith.constant 0 : i32
    %9 = vector.broadcast %c0_i32_4 : i32 to vector<8x288xi32>
    %10 = arith.cmpi ne, %8, %9 : vector<8x288xi32>
    %c0_i32_5 = arith.constant 0 : i32
    %11 = vector.broadcast %c0_i32_5 : i32 to vector<8x288xi32>
    %12 = arith.cmpi slt, %8, %11 : vector<8x288xi32>
    %c0_i32_6 = arith.constant 0 : i32
    %13 = arith.cmpi slt, %6, %c0_i32_6 : i32
    %14 = vector.broadcast %13 : i1 to vector<8x288xi1>
    %15 = vector.broadcast %14 : vector<8x288xi1> to vector<8x288xi1>
    %16 = arith.xori %12, %15 : vector<8x288xi1>
    %17 = arith.andi %16, %10 : vector<8x288xi1>
    %18 = vector.broadcast %6 : i32 to vector<8x288xi32>
    %19 = arith.addi %8, %18 : vector<8x288xi32>
    %20 = arith.select %17, %19, %8 : vector<8x288xi1>, vector<8x288xi32>
    %c16_i32 = arith.constant 16 : i32
    %21 = vector.broadcast %c16_i32 : i32 to vector<8x288xi32>
    %22 = arith.cmpi slt, %20, %21 : vector<8x288xi32>
    %c0_7 = arith.constant 0 : index
    %c0_8 = arith.constant 0 : index
    %c0_9 = arith.constant 0 : index
    %23 = vector.load %arg1[%c0_7, %c0_8, %c0_9] : memref<1x4x342xbf16, #tpu.memory_space<vmem>>, vector<1x4x342xbf16>
    %24 = vector.shape_cast %23 : vector<1x4x342xbf16> to vector<4x342xbf16>
    %25 = arith.extf %24 : vector<4x342xbf16> to vector<4x342xf32>
    %26 = vector.extract_strided_slice %25 {offsets = [0, 0], sizes = [4, 288], strides = [1, 1]} : vector<4x342xf32> to vector<4x288xf32>
    %27 = vector.extract_strided_slice %25 {offsets = [0, 1], sizes = [4, 288], strides = [1, 1]} : vector<4x342xf32> to vector<4x288xf32>
    %28 = vector.extract_strided_slice %25 {offsets = [0, 2], sizes = [4, 288], strides = [1, 1]} : vector<4x342xf32> to vector<4x288xf32>
    %29 = vector.extract_strided_slice %25 {offsets = [0, 18], sizes = [4, 288], strides = [1, 1]} : vector<4x342xf32> to vector<4x288xf32>
    %30 = vector.extract_strided_slice %25 {offsets = [0, 19], sizes = [4, 288], strides = [1, 1]} : vector<4x342xf32> to vector<4x288xf32>
    %31 = vector.extract_strided_slice %25 {offsets = [0, 20], sizes = [4, 288], strides = [1, 1]} : vector<4x342xf32> to vector<4x288xf32>
    %32 = vector.extract_strided_slice %25 {offsets = [0, 36], sizes = [4, 288], strides = [1, 1]} : vector<4x342xf32> to vector<4x288xf32>
    %33 = vector.extract_strided_slice %25 {offsets = [0, 37], sizes = [4, 288], strides = [1, 1]} : vector<4x342xf32> to vector<4x288xf32>
    %34 = vector.extract_strided_slice %25 {offsets = [0, 38], sizes = [4, 288], strides = [1, 1]} : vector<4x342xf32> to vector<4x288xf32>
    %35 = tpu.concatenate %26, %27, %28, %29, %30, %31, %32, %33, %34 in 0 : vector<4x288xf32>, vector<4x288xf32>, vector<4x288xf32>, vector<4x288xf32>, vector<4x288xf32>, vector<4x288xf32>, vector<4x288xf32>, vector<4x288xf32>, vector<4x288xf32> -> vector<36x288xf32>
    %36 = arith.truncf %35 : vector<36x288xf32> to vector<36x288xbf16>
    %c0_10 = arith.constant 0 : index
    %c0_11 = arith.constant 0 : index
    %37 = vector.load %arg2[%c0_10, %c0_11] : memref<8x36xbf16, #tpu.memory_space<vmem>>, vector<8x36xbf16>
    %cst = arith.constant dense<0.000000e+00> : vector<8x288xf32>
    %38 = tpu.matmul %37, %36, %cst {dimension_numbers = #tpu.dot_dimension_numbers<[1], [0], [0], [1], [0, 0, 1, 1], [], []>} : vector<8x36xbf16>, vector<36x288xbf16>, vector<8x288xf32> -> vector<8x288xf32>
    %39 = vector.broadcast %0 : vector<8x1xf32> to vector<8x288xf32>
    %40 = arith.mulf %38, %39 : vector<8x288xf32>
    %41 = vector.broadcast %1 : vector<8x1xf32> to vector<8x288xf32>
    %42 = arith.addf %40, %41 : vector<8x288xf32>
    %cst_12 = arith.constant 0.000000e+00 : f32
    %43 = vector.broadcast %cst_12 : f32 to vector<8x288xf32>
    %44 = arith.maximumf %42, %43 : vector<8x288xf32>
    %cst_13 = arith.constant 0.000000e+00 : f32
    %45 = vector.broadcast %cst_13 : f32 to vector<8x288xf32>
    %46 = arith.select %22, %44, %45 : vector<8x288xi1>, vector<8x288xf32>
    %cst_14 = arith.constant 0.000000e+00 : f32
    %47 = vector.broadcast %cst_14 : f32 to vector<8x19xf32>
    %cst_15 = arith.constant 0.000000e+00 : f32
    %48 = vector.broadcast %cst_15 : f32 to vector<8x35xf32>
    %49 = tpu.concatenate %47, %46, %48 in 1 : vector<8x19xf32>, vector<8x288xf32>, vector<8x35xf32> -> vector<8x342xf32>
    %50 = vector.extract_strided_slice %49 {offsets = [0, 0], sizes = [8, 288], strides = [1, 1]} : vector<8x342xf32> to vector<8x288xf32>
    %51 = vector.extract_strided_slice %49 {offsets = [0, 1], sizes = [8, 288], strides = [1, 1]} : vector<8x342xf32> to vector<8x288xf32>
    %52 = vector.extract_strided_slice %49 {offsets = [0, 2], sizes = [8, 288], strides = [1, 1]} : vector<8x342xf32> to vector<8x288xf32>
    %53 = vector.extract_strided_slice %49 {offsets = [0, 18], sizes = [8, 288], strides = [1, 1]} : vector<8x342xf32> to vector<8x288xf32>
    %54 = vector.extract_strided_slice %49 {offsets = [0, 19], sizes = [8, 288], strides = [1, 1]} : vector<8x342xf32> to vector<8x288xf32>
    %55 = vector.extract_strided_slice %49 {offsets = [0, 20], sizes = [8, 288], strides = [1, 1]} : vector<8x342xf32> to vector<8x288xf32>
    %56 = vector.extract_strided_slice %49 {offsets = [0, 36], sizes = [8, 288], strides = [1, 1]} : vector<8x342xf32> to vector<8x288xf32>
    %57 = vector.extract_strided_slice %49 {offsets = [0, 37], sizes = [8, 288], strides = [1, 1]} : vector<8x342xf32> to vector<8x288xf32>
    %58 = vector.extract_strided_slice %49 {offsets = [0, 38], sizes = [8, 288], strides = [1, 1]} : vector<8x342xf32> to vector<8x288xf32>
    %59 = tpu.concatenate %50, %51, %52, %53, %54, %55, %56, %57, %58 in 0 : vector<8x288xf32>, vector<8x288xf32>, vector<8x288xf32>, vector<8x288xf32>, vector<8x288xf32>, vector<8x288xf32>, vector<8x288xf32>, vector<8x288xf32>, vector<8x288xf32> -> vector<72x288xf32>
    %60 = arith.truncf %59 : vector<72x288xf32> to vector<72x288xbf16>
    %c0_16 = arith.constant 0 : index
    %c0_17 = arith.constant 0 : index
    %61 = vector.load %arg3[%c0_16, %c0_17] : memref<8x72xbf16, #tpu.memory_space<vmem>>, vector<8x72xbf16>
    %cst_18 = arith.constant dense<0.000000e+00> : vector<8x288xf32>
    %62 = tpu.matmul %61, %60, %cst_18 {dimension_numbers = #tpu.dot_dimension_numbers<[1], [0], [0], [1], [0, 0, 1, 1], [], []>} : vector<8x72xbf16>, vector<72x288xbf16>, vector<8x288xf32> -> vector<8x288xf32>
    %63 = vector.broadcast %2 : vector<8x1xf32> to vector<8x288xf32>
    %64 = arith.mulf %62, %63 : vector<8x288xf32>
    %65 = vector.broadcast %3 : vector<8x1xf32> to vector<8x288xf32>
    %66 = arith.addf %64, %65 : vector<8x288xf32>
    %67 = vector.extract_strided_slice %25 {offsets = [0, 19], sizes = [4, 288], strides = [1, 1]} : vector<4x342xf32> to vector<4x288xf32>
    %cst_19 = arith.constant 0.000000e+00 : f32
    %68 = vector.broadcast %cst_19 : f32 to vector<2x288xf32>
    %69 = tpu.concatenate %68, %67, %68 in 0 : vector<2x288xf32>, vector<4x288xf32>, vector<2x288xf32> -> vector<8x288xf32>
    %70 = arith.addf %66, %69 : vector<8x288xf32>
    %cst_20 = arith.constant 0.000000e+00 : f32
    %71 = vector.broadcast %cst_20 : f32 to vector<8x288xf32>
    %72 = arith.maximumf %70, %71 : vector<8x288xf32>
    %73 = vector.shape_cast %72 : vector<8x288xf32> to vector<1x8x288xf32>
    %c0_21 = arith.constant 0 : index
    %c0_22 = arith.constant 0 : index
    %c0_23 = arith.constant 0 : index
    %74 = vector.load %arg5[%c0_21, %c0_22, %c0_23] : memref<1x8x288xf32, #tpu.memory_space<vmem>>, vector<1x8x288xf32>
    tpu.vector_store %arg5[%c0_21, %c0_22, %c0_23], %73 {strides = array<i32>} : memref<1x8x288xf32, #tpu.memory_space<vmem>>, vector<1x8x288xf32>,
    return
  }
  func.func @transform_0(%arg0: i32) -> (i32, i32, i32) {
    %c0_i32 = arith.constant 0 : i32
    %c0_i32_0 = arith.constant 0 : i32
    %c0_i32_1 = arith.constant 0 : i32
    return %arg0, %c0_i32, %c0_i32_0 : i32, i32, i32
  }
  func.func @transform_1(%arg0: i32) -> (i32, i32) {
    %c0_i32 = arith.constant 0 : i32
    %c0_i32_0 = arith.constant 0 : i32
    %c0_i32_1 = arith.constant 0 : i32
    return %c0_i32, %c0_i32_0 : i32, i32
  }
  func.func @transform_2(%arg0: i32) -> (i32, i32) {
    %c0_i32 = arith.constant 0 : i32
    %c0_i32_0 = arith.constant 0 : i32
    %c0_i32_1 = arith.constant 0 : i32
    return %c0_i32, %c0_i32_0 : i32, i32
  }
  func.func @transform_3(%arg0: i32) -> (i32, i32) {
    %c0_i32 = arith.constant 0 : i32
    %c0_i32_0 = arith.constant 0 : i32
    %c0_i32_1 = arith.constant 0 : i32
    return %c0_i32, %c0_i32_0 : i32, i32
  }
  func.func @transform_4(%arg0: i32) -> (i32, i32, i32) {
    %c0_i32 = arith.constant 0 : i32
    %c0_i32_0 = arith.constant 0 : i32
    %c0_i32_1 = arith.constant 0 : i32
    return %arg0, %c0_i32, %c0_i32_0 : i32, i32, i32
  }
}

</mosaic_0001>

<llo_original>
// kernel: tpu_custom_call.1
$region0: #{tpu_custom_call.1}
  #allocation0 [shape = 'u32[]', space=smem, size = 0x4, offset = 0x4, fixed_abs, tag = 'smem constant byte address 0x4 - core index']
  #allocation1 [shape = 'u32[144,128]{1,0:T(1,128)}', space=vmem, size = 0x12000, scoped, tag = 'internal scratch']
  %s0 = inlined_call_operand.vmem [shape: bf16[2,4,342], index: 0, kind: input, shape index: {}]
  %s1 = inlined_call_operand.hbm [shape: bf16[8,36], index: 1, kind: input, shape index: {}]
  %s2 = inlined_call_operand.hbm [shape: bf16[8,72], index: 2, kind: input, shape index: {}]
  %s3 = inlined_call_operand.vmem [shape: f32[8,4], index: 3, kind: input, shape index: {}]
  %s4 = inlined_call_operand.hbm [shape: f32[2,8,288], index: 4, kind: output, shape index: {}]
  %s5 = sld [smem:[#allocation0]]
  $region57: #{tpu_custom_call.1} parent=0
    _
  %s7 = ssub.s32 1, %s5
  %s8 = scalar_select 0, %s7, %s5
  $region1: #{tpu_custom_call.1} parent=0
    #allocation2 [shape = 'u8[2048]{0}', space=vmem, size = 0x800, scoped, tag = 'input window, operand 1, single buffered']
    #allocation3 [shape = 's32[2]{0}', space=sflag, size = 0x8, scoped, tag = 'scoped memory for tpu_custom_call.1']
    #allocation4 [shape = 's32[2]{0}', space=sflag, size = 0x8, scoped, tag = 'scoped memory for tpu_custom_call.1']
    #allocation5 [shape = 'u8[2048]{0}', space=vmem, size = 0x800, scoped, tag = 'input window, operand 2, single buffered']
    #allocation6 [shape = 's32[1]{0}', space=sflag, size = 0x4, scoped, tag = 'scoped memory for tpu_custom_call.1']
    #allocation7 [shape = 'u8[24576]{0}', space=vmem, size = 0x6000, scoped, tag = 'output window, operand 0']
    %9 = vsyncpa [#allocation3], 0
    %10 = vsyncpa [#allocation6], 0
    %11 = vsyncpa [#allocation4], 0
    %s12 = scalar_lea.sflag [#allocation4], 1
    %13 = vsyncpa %s12, 0
    loop: start=0, step=1, limit=4
    $region2: #{tpu_custom_call.1} parent=1 // loop_pre_header
      _
    $region3: #{tpu_custom_call.1} parent=1 // loop_header
      %s15 = sphi 0, %s19
      %p16 = scmp.ge.s32.totalorder %s15, 4
      %s25 = sphi 0, %s27
      %s28 = sphi 0, %s25
      %s29 = sphi 0, %s28
      %s45 = sphi 0, %s29
      %s49 = sphi 0, %s49
      %s51 = sphi 0, %s49
      %s52 = sphi 0, %s51
      %s66 = sphi 0, %s52
      %s70 = sphi 0, %s70
      %s72 = sphi 0, %s70
      %s73 = sphi 0, %s72
      %s87 = sphi 0, %s73
      %s91 = sphi 0, %s91
      %s93 = sphi 0, %s91
      %s94 = sphi 0, %s93
      %s108 = sphi 0, %s94
      %s114 = sphi 0, %s116
      %s117 = sphi 0, %s114
      %s118 = sphi 0, %s117
      %s134 = sphi 0, %s118
    $region4: #{tpu_custom_call.1} parent=1 // loop_header_branch
      %18 = sbr.rel (%p16) target = $region8
    $region5: #{tpu_custom_call.1} parent=1 // loop_body
      %s20 = ssub.s32 %s15, 1
      %s21 = ssub.s32 %s15, 2
      %s22 = sadd.s32 %s15, 1
      %s23 = ssub.s32 %s15, %s22
      %p24 = scmp.eq.s32.totalorder %s23, 0
      %s26 = sadd.s32 %s25, 1
      %s27 = scalar_select %p24, %s25, %s26
      %p30 = pneg %p24
      %p31 = scmp.eq.s32.totalorder %s15, 1
      %p32 = por %p30, %p31
      %p33 = scmp.ne.s32.totalorder %s25, %s28
      %p34 = scmp.eq.s32.totalorder %s15, 0
      %p35 = por %p33, %p34
      %p36 = scmp.ne.s32.totalorder %s25, %s28
      %p37 = scmp.eq.s32.totalorder %s20, 1
      %p38 = por %p36, %p37
      %p39 = scmp.ne.s32.totalorder %s28, %s29
      %p40 = scmp.eq.s32.totalorder %s20, 0
      %p41 = por %p39, %p40
      %p42 = scmp.ne.s32.totalorder %s28, %s29
      %p43 = scmp.eq.s32.totalorder %s21, 1
      %p44 = por %p42, %p43
      %p46 = scmp.ne.s32.totalorder %s29, %s45
      %p47 = scmp.eq.s32.totalorder %s21, 0
      %p48 = por %p46, %p47
      %s50 = sadd.s32 %s49, 1
      %p53 = scmp.eq.s32.totalorder %s15, 1
      %p54 = scmp.ne.s32.totalorder %s49, %s51
      %p55 = scmp.eq.s32.totalorder %s15, 0
      %p56 = por %p54, %p55
      %p57 = scmp.ne.s32.totalorder %s49, %s51
      %p58 = scmp.eq.s32.totalorder %s20, 1
      %p59 = por %p57, %p58
      %p60 = scmp.ne.s32.totalorder %s51, %s52
      %p61 = scmp.eq.s32.totalorder %s20, 0
      %p62 = por %p60, %p61
      %p63 = scmp.ne.s32.totalorder %s51, %s52
      %p64 = scmp.eq.s32.totalorder %s21, 1
      %p65 = por %p63, %p64
      %p67 = scmp.ne.s32.totalorder %s52, %s66
      %p68 = scmp.eq.s32.totalorder %s21, 0
      %p69 = por %p67, %p68
      %s71 = sadd.s32 %s70, 1
      %p74 = scmp.eq.s32.totalorder %s15, 1
      %p75 = scmp.ne.s32.totalorder %s70, %s72
      %p76 = scmp.eq.s32.totalorder %s15, 0
      %p77 = por %p75, %p76
      %p78 = scmp.ne.s32.totalorder %s70, %s72
      %p79 = scmp.eq.s32.totalorder %s20, 1
      %p80 = por %p78, %p79
      %p81 = scmp.ne.s32.totalorder %s72, %s73
      %p82 = scmp.eq.s32.totalorder %s20, 0
      %p83 = por %p81, %p82
      %p84 = scmp.ne.s32.totalorder %s72, %s73
      %p85 = scmp.eq.s32.totalorder %s21, 1
      %p86 = por %p84, %p85
      %p88 = scmp.ne.s32.totalorder %s73, %s87
      %p89 = scmp.eq.s32.totalorder %s21, 0
      %p90 = por %p88, %p89
      %s92 = sadd.s32 %s91, 1
      %p95 = scmp.eq.s32.totalorder %s15, 1
      %p96 = scmp.ne.s32.totalorder %s91, %s93
      %p97 = scmp.eq.s32.totalorder %s15, 0
      %p98 = por %p96, %p97
      %p99 = scmp.ne.s32.totalorder %s91, %s93
      %p100 = scmp.eq.s32.totalorder %s20, 1
      %p101 = por %p99, %p100
      %p102 = scmp.ne.s32.totalorder %s93, %s94
      %p103 = scmp.eq.s32.totalorder %s20, 0
      %p104 = por %p102, %p103
      %p105 = scmp.ne.s32.totalorder %s93, %s94
      %p106 = scmp.eq.s32.totalorder %s21, 1
      %p107 = por %p105, %p106
      %p109 = scmp.ne.s32.totalorder %s94, %s108
      %p110 = scmp.eq.s32.totalorder %s21, 0
      %p111 = por %p109, %p110
      %s112 = ssub.s32 %s15, %s22
      %p113 = scmp.eq.s32.totalorder %s112, 0
      %s115 = sadd.s32 %s114, 1
      %s116 = scalar_select %p113, %s114, %s115
      %p119 = pneg %p113
      %p120 = scmp.eq.s32.totalorder %s15, 1
      %p121 = por %p119, %p120
      %p122 = scmp.ne.s32.totalorder %s114, %s117
      %p123 = scmp.eq.s32.totalorder %s15, 0
      %p124 = por %p122, %p123
      %p125 = scmp.ne.s32.totalorder %s114, %s117
      %p126 = scmp.eq.s32.totalorder %s20, 1
      %p127 = por %p125, %p126
      %p128 = scmp.ne.s32.totalorder %s117, %s118
      %p129 = scmp.eq.s32.totalorder %s20, 0
      %p130 = por %p128, %p129
      %p131 = scmp.ne.s32.totalorder %s117, %s118
      %p132 = scmp.eq.s32.totalorder %s21, 1
      %p133 = por %p131, %p132
      %p135 = scmp.ne.s32.totalorder %s118, %s134
      %p136 = scmp.eq.s32.totalorder %s21, 0
      %p137 = por %p135, %p136
      %p138 = scmp.le.s32.totalorder 1, %s15
      %p139 = scmp.lt.s32.totalorder %s15, 3
      %p140 = pnand %p138, %p139
      %p141 = pneg %p140
      // Predicated region
      $region9: #{tpu_custom_call.1} parent=5 // pred_check
        _
      $region10: #{tpu_custom_call.1} parent=5 // pred_check_branch
        %143 = sbr.rel (%p140) target = $region12
      $region11: #{tpu_custom_call.1} parent=5 // pred_region
        %s144 = ssub.s32 %s15, 1
        // Predicated region
        $region13: #{tpu_custom_call.1} parent=11 // pred_check
          %p145 = pneg %p62
        $region14: #{tpu_custom_call.1} parent=11 // pred_check_branch
          %147 = sbr.rel (%p145) target = $region16
        $region15: #{tpu_custom_call.1} parent=11 // pred_region
          %s149 = ssub.s32 64, 64
          %150 = vsyncadd [#allocation3], %s149
          %s152 = sshll.u32 [#allocation2], 4
          %s153 = int_to_ptr.vmem [resolvable:$true] %s152
          %155 = dma.hbm_to_vmem [thread:$0]  %s1, 64, %s153, [#allocation3]
        $region16: #{tpu_custom_call.1} parent=11 // pred_fallthru
          _
        // Predicated region
        $region17: #{tpu_custom_call.1} parent=11 // pred_check
          %p156 = pneg %p83
        $region18: #{tpu_custom_call.1} parent=11 // pred_check_branch
          %158 = sbr.rel (%p156) target = $region20
        $region19: #{tpu_custom_call.1} parent=11 // pred_region
          %s160 = ssub.s32 64, 64
          %161 = vsyncadd [#allocation6], %s160
          %s163 = sshll.u32 [#allocation5], 4
          %s164 = int_to_ptr.vmem [resolvable:$true] %s163
          %166 = dma.hbm_to_vmem [thread:$0]  %s2, 64, %s164, [#allocation6]
        $region20: #{tpu_custom_call.1} parent=11 // pred_fallthru
          _
        // Predicated region
        $region21: #{tpu_custom_call.1} parent=11 // pred_check
          %p167 = pneg %p104
        $region22: #{tpu_custom_call.1} parent=11 // pred_check_branch
          %169 = sbr.rel (%p167) target = $region24
        $region23: #{tpu_custom_call.1} parent=11 // pred_region
          _
        $region24: #{tpu_custom_call.1} parent=11 // pred_fallthru
          _
      $region12: #{tpu_custom_call.1} parent=5 // pred_fallthru
        _
      %p170 = scmp.lt.s32.totalorder %s15, 2
      // Predicated region
      $region25: #{tpu_custom_call.1} parent=5 // pred_check
        %p171 = pneg %p170
      $region26: #{tpu_custom_call.1} parent=5 // pred_check_branch
        %173 = sbr.rel (%p171) target = $region28
      $region27: #{tpu_custom_call.1} parent=5 // pred_region
        // Predicated region
        $region29: #{tpu_custom_call.1} parent=27 // pred_check
          %p174 = pneg %p35
        $region30: #{tpu_custom_call.1} parent=27 // pred_check_branch
          %176 = sbr.rel (%p174) target = $region32
        $region31: #{tpu_custom_call.1} parent=27 // pred_region
          %p177 = scmp.lt.s32.totalorder %s15, 1
          %s178 = scalar_select %p177, %s15, 1
          %s179 = smul.addr %s178, 3
          %s180 = smul.addr %s179, 2
          %s181 = scalar_lea.vmem %s0, %s180
        $region32: #{tpu_custom_call.1} parent=27 // pred_fallthru
          _
      $region28: #{tpu_custom_call.1} parent=5 // pred_fallthru
        _
      %p182 = scmp.le.s32.totalorder 1, %s15
      %p183 = scmp.lt.s32.totalorder %s15, 3
      %p184 = pnand %p182, %p183
      %p185 = pneg %p184
      // Predicated region
      $region33: #{tpu_custom_call.1} parent=5 // pred_check
        _
      $region34: #{tpu_custom_call.1} parent=5 // pred_check_branch
        %187 = sbr.rel (%p184) target = $region36
      $region35: #{tpu_custom_call.1} parent=5 // pred_region
        %s188 = ssub.s32 %s15, 1
        // Predicated region
        $region37: #{tpu_custom_call.1} parent=35 // pred_check
          %p189 = pneg %p62
        $region38: #{tpu_custom_call.1} parent=35 // pred_check_branch
          %191 = sbr.rel (%p189) target = $region40
        $region39: #{tpu_custom_call.1} parent=35 // pred_region
          %192 = dma.done [#allocation3], 64
        $region40: #{tpu_custom_call.1} parent=35 // pred_fallthru
          _
        // Predicated region
        $region41: #{tpu_custom_call.1} parent=35 // pred_check
          %p193 = pneg %p83
        $region42: #{tpu_custom_call.1} parent=35 // pred_check_branch
          %195 = sbr.rel (%p193) target = $region44
        $region43: #{tpu_custom_call.1} parent=35 // pred_region
          %196 = dma.done [#allocation6], 64
        $region44: #{tpu_custom_call.1} parent=35 // pred_fallthru
          _
        %p197 = scmp.lt.s32.totalorder %s20, 1
        %s198 = scalar_select %p197, %s20, 1
        %s199 = smul.addr %s198, 3
        %s200 = smul.addr %s199, 2
        %s201 = scalar_lea.vmem %s0, %s200
        %p202 = pneg %p41
        %p203 = pneg %p38
        %p204 = pneg %p62
        %p205 = pneg %p59
        %p206 = pneg %p83
        %p207 = pneg %p80
        %p208 = pneg %p104
        %p209 = pneg %p101
        %p210 = pneg %p130
        %p211 = pneg %p127
        %s212 = sand.u32 %s117, 1
        %s213 = scalar_lea.sflag [#allocation4], %s212
        %s214 = sand.u32 %s117, 1
        %s215 = smul.addr %s214, 24
        %s216 = scalar_lea.vmem [#allocation7], %s215
        %p217 = scmp.lt.s32.totalorder %s20, 1
        %s218 = scalar_select %p217, %s20, 1
        %s219 = smul.addr %s218, 3
        %s220 = smul.addr %s219, 2
        %s221 = scalar_lea.vmem %s0, %s220
        %v223 = vld [vmem:[%s3] sm:$0xff]
        %v224 = vlaneseq
        %v225 = vand.u32 %v224, 127
        %v226 = vadd.s32 %v225, 128
        %v227 = vadd.s32 %v225, 256
        %vm228 = vcmp.lt.s32.totalorder %v225, 0
        %v229 = vsub.s32 0, %v225
        %v230 = vsel %vm228, %v229, %v225
        %v231 = vmul.u32.u64.compose %v230, 3817748708
        %v232 = vextract.low.u32 %v231
        %v233 = vextract.high.u32 %v231
        %v234 = vshrl.u32 %v233, 4
        %v235 = vmul.u32 %v234, 18
        %v236 = vsub.s32 %v230, %v235
        %v237 = vsub.s32 0, %v236
        %v238 = vsel %vm228, %v237, %v236
        %vm239 = vcmp.lt.s32.totalorder %v226, 0
        %v240 = vsub.s32 0, %v226
        %v241 = vsel %vm239, %v240, %v226
        %v242 = vmul.u32.u64.compose %v241, 3817748708
        %v243 = vextract.low.u32 %v242
        %v244 = vextract.high.u32 %v242
        %v245 = vshrl.u32 %v244, 4
        %v246 = vmul.u32 %v245, 18
        %v247 = vsub.s32 %v241, %v246
        %v248 = vsub.s32 0, %v247
        %v249 = vsel %vm239, %v248, %v247
        %vm250 = vcmp.lt.s32.totalorder %v227, 0
        %v251 = vsub.s32 0, %v227
        %v252 = vsel %vm250, %v251, %v227
        %v253 = vmul.u32.u64.compose %v252, 3817748708
        %v254 = vextract.low.u32 %v253
        %v255 = vextract.high.u32 %v253
        %v256 = vshrl.u32 %v255, 4
        %v257 = vmul.u32 %v256, 18
        %v258 = vsub.s32 %v252, %v257
        %v259 = vsub.s32 0, %v258
        %v260 = vsel %vm250, %v259, %v258
        %vm261 = vcmp.ne.s32.totalorder %v238, 0
        %vm262 = vcmp.ne.s32.totalorder %v249, 0
        %vm263 = vcmp.ne.s32.totalorder %v260, 0
        %vm264 = vcmp.lt.s32.totalorder %v238, 0
        %vm265 = vcmp.lt.s32.totalorder %v249, 0
        %vm266 = vcmp.lt.s32.totalorder %v260, 0
        %vm267 = vmand %vm264, %vm261
        %vm268 = vmand %vm265, %vm262
        %vm269 = vmand %vm266, %vm263
        %v270 = vadd.s32 %v238, 18
        %v271 = vadd.s32 %v249, 18
        %v272 = vadd.s32 %v260, 18
        %v273 = vsel %vm267, %v270, %v238
        %v274 = vsel %vm268, %v271, %v249
        %v275 = vsel %vm269, %v272, %v260
        %vm276 = vcmp.lt.s32.totalorder %v273, 16
        %vm277 = vcmp.lt.s32.totalorder %v274, 16
        %vm278 = vcmp.lt.s32.totalorder %v275, 16
        %v279 = vld [vmem:[%s221] sm:$0x3f]
        %v280 = vunpack.c.l.bf16 %v279
        %v281 = vunpack.c.h.bf16 %v279
        %v284 = vcombine.high %v280, %v280
        %v286 = vcombine.low %v280, %v280
        %v287 = vcombine.low %v281, %v281
        %288 = vrot.lane.b32.xlu0 %v286, 127
        %v289 = vpop.permute.xlu0 %288
        %290 = vrot.lane.b32.xlu0 %v280, 127
        %v291 = vpop.permute.xlu0 %290
        %292 = vrot.lane.b32.xlu0 %v287, 127
        %v293 = vpop.permute.xlu0 %292
        %vm294 = vcmask 1039360
        %v295 = vsel %vm294, %v289, %v291
        %v296 = vsel %vm294, %v291, %v293
        %300 = vrot.lane.b32.xlu0 %v280, 126
        %v301 = vpop.permute.xlu0 %300
        %302 = vrot.lane.b32.xlu0 %v284, 126
        %v303 = vpop.permute.xlu0 %302
        %304 = vrot.lane.b32.xlu0 %v281, 126
        %v305 = vpop.permute.xlu0 %304
        %vm306 = vcmask 1031168
        %v307 = vsel %vm306, %v301, %v303
        %v308 = vsel %vm306, %v303, %v305
        %312 = vrot.lane.b32.xlu0 %v286, 110
        %v313 = vpop.permute.xlu0 %312
        %314 = vrot.lane.b32.xlu0 %v280, 110
        %v315 = vpop.permute.xlu0 %314
        %316 = vrot.lane.b32.xlu0 %v287, 110
        %v317 = vpop.permute.xlu0 %316
        %vm318 = vcmask 900096
        %v319 = vsel %vm318, %v313, %v315
        %v320 = vsel %vm318, %v315, %v317
        %324 = vrot.lane.b32.xlu0 %v280, 109
        %v325 = vpop.permute.xlu0 %324
        %326 = vrot.lane.b32.xlu0 %v284, 109
        %v327 = vpop.permute.xlu0 %326
        %328 = vrot.lane.b32.xlu0 %v281, 109
        %v329 = vpop.permute.xlu0 %328
        %vm330 = vcmask 891904
        %v331 = vsel %vm330, %v325, %v327
        %v332 = vsel %vm330, %v327, %v329
        %336 = vrot.lane.b32.xlu0 %v286, 108
        %v337 = vpop.permute.xlu0 %336
        %338 = vrot.lane.b32.xlu0 %v280, 108
        %v339 = vpop.permute.xlu0 %338
        %340 = vrot.lane.b32.xlu0 %v287, 108
        %v341 = vpop.permute.xlu0 %340
        %vm342 = vcmask 883712
        %v343 = vsel %vm342, %v337, %v339
        %v344 = vsel %vm342, %v339, %v341
        %348 = vrot.lane.b32.xlu0 %v280, 92
        %v349 = vpop.permute.xlu0 %348
        %350 = vrot.lane.b32.xlu0 %v284, 92
        %v351 = vpop.permute.xlu0 %350
        %352 = vrot.lane.b32.xlu0 %v281, 92
        %v353 = vpop.permute.xlu0 %352
        %vm354 = vcmask 752640
        %v355 = vsel %vm354, %v349, %v351
        %v356 = vsel %vm354, %v351, %v353
        %360 = vrot.lane.b32.xlu0 %v286, 91
        %v361 = vpop.permute.xlu0 %360
        %362 = vrot.lane.b32.xlu0 %v280, 91
        %v363 = vpop.permute.xlu0 %362
        %364 = vrot.lane.b32.xlu0 %v287, 91
        %v365 = vpop.permute.xlu0 %364
        %vm366 = vcmask 744448
        %v367 = vsel %vm366, %v361, %v363
        %v368 = vsel %vm366, %v363, %v365
        %372 = vrot.lane.b32.xlu0 %v280, 90
        %v373 = vpop.permute.xlu0 %372
        %374 = vrot.lane.b32.xlu0 %v284, 90
        %v375 = vpop.permute.xlu0 %374
        %376 = vrot.lane.b32.xlu0 %v281, 90
        %v377 = vpop.permute.xlu0 %376
        %vm378 = vcmask 736256
        %v379 = vsel %vm378, %v373, %v375
        %v380 = vsel %vm378, %v375, %v377
        %vm384 = vcmask 1043456
        %v385 = vsel %vm384, %v280, %v295
        %v386 = vsel %vm384, %v284, %v296
        %v387 = vsel %vm384, %v281, %v293
        %v388 = vsel %vm384, %v307, %v319
        %v389 = vsel %vm384, %v308, %v320
        %v390 = vsel %vm384, %v305, %v317
        %v391 = vsel %vm384, %v331, %v343
        %v392 = vsel %vm384, %v332, %v344
        %v393 = vsel %vm384, %v329, %v341
        %v394 = vsel %vm384, %v355, %v367
        %v395 = vsel %vm384, %v356, %v368
        %v396 = vsel %vm384, %v353, %v365
        %v397 = vpack.c.bf16 %v388, %v385
        %v398 = vpack.c.bf16 %v389, %v386
        %v399 = vpack.c.bf16 %v390, %v387
        %v400 = vpack.c.bf16 %v394, %v391
        %v401 = vpack.c.bf16 %v395, %v392
        %v402 = vpack.c.bf16 %v396, %v393
        %v403 = vpack.c.bf16 %v379, %v379
        %v404 = vpack.c.bf16 %v380, %v380
        %v405 = vpack.c.bf16 %v377, %v377
        %v406 = vld [vmem:[#allocation2] sm:$0xf]
        %vm407 = vcmask 293888
        %v409 = vsel %vm407, %v406, 0
        %vm411 = vcmask 1041408
        %v413 = vsel %vm411, %v403, 0
        %v416 = vsel %vm411, %v404, 0
        %v419 = vsel %vm411, %v405, 0
        %421 = vmatprep.subr.bf16.mxu0 0
        %422 = vmatpush1.bf16.msra.mxu0 0
        %423 = vmatprep.subr.bf16.mxu0 0
        %424 = vmatpush1.bf16.msra.mxu0 0
        %425 = vmatprep.subr.bf16.mxu0 0
        %426 = vmatpush1.bf16.msra.mxu0 0
        %427 = vmatprep.subr.bf16.mxu0 0
        %428 = vmatpush1.bf16.msra.mxu0 0
        %429 = vmatprep.subr.bf16.mxu0 0
        %430 = vmatpush1.bf16.msra.mxu0 0
        %431 = vmatprep.subr.bf16.mxu0 %v416
        %432 = vmatpush1.bf16.msra.mxu0 %v413
        %433 = vmatprep.subr.bf16.mxu0 %v401
        %434 = vmatpush1.bf16.msra.mxu0 %v400
        %435 = vmatprep.subr.bf16.mxu0 %v398
        %436 = vmatpush1.bf16.msra.mxu0 %v397
        %437 = vmatprep.subr.bf16.mxu0 0
        %438 = vmatpush2.bf16.msra.mxu0 0
        %439 = vmatprep.subr.bf16.mxu0 0
        %440 = vmatpush2.bf16.msra.mxu0 0
        %441 = vmatprep.subr.bf16.mxu0 0
        %442 = vmatpush2.bf16.msra.mxu0 0
        %443 = vmatprep.subr.bf16.mxu0 0
        %444 = vmatpush2.bf16.msra.mxu0 0
        %445 = vmatprep.subr.bf16.mxu0 0
        %446 = vmatpush2.bf16.msra.mxu0 0
        %447 = vmatprep.subr.bf16.mxu0 0
        %448 = vmatpush2.bf16.msra.mxu0 0
        %449 = vmatprep.subr.bf16.mxu0 0
        %450 = vmatpush2.bf16.msra.mxu0 0
        %451 = vmatprep.subr.bf16.mxu0 0
        %452 = vmatpush2.bf16.msra.mxu0 0
        %453 = vmatprep.mubr.bf16.mxu0 0
        %454 = vmatmul.mubr.bf16.gmra.mxu0 %v409
        %v455 = vpop.f32.mrf.mxu0
        %v456 = vadd.f32 0.0, %v455
        %v457 = vpop.f32.mrf.mxu0
        %v458 = vadd.f32 0.0, %v457
        %v459 = vpop.f32.mrf.mxu0
        %v460 = vpop.f32.mrf.mxu0
        %461 = vdwg.mxu0
        %462 = vmatprep.subr.bf16.mxu0 0
        %463 = vmatpush1.bf16.msra.mxu0 0
        %464 = vmatprep.subr.bf16.mxu0 0
        %465 = vmatpush1.bf16.msra.mxu0 0
        %466 = vmatprep.subr.bf16.mxu0 0
        %467 = vmatpush1.bf16.msra.mxu0 0
        %468 = vmatprep.subr.bf16.mxu0 0
        %469 = vmatpush1.bf16.msra.mxu0 0
        %470 = vmatprep.subr.bf16.mxu0 0
        %471 = vmatpush1.bf16.msra.mxu0 0
        %472 = vmatprep.subr.bf16.mxu0 0
        %473 = vmatpush1.bf16.msra.mxu0 %v419
        %474 = vmatprep.subr.bf16.mxu0 0
        %475 = vmatpush1.bf16.msra.mxu0 %v402
        %476 = vmatprep.subr.bf16.mxu0 0
        %477 = vmatpush1.bf16.msra.mxu0 %v399
        %478 = vmatprep.subr.bf16.mxu0 0
        %479 = vmatpush2.bf16.msra.mxu0 0
        %480 = vmatprep.subr.bf16.mxu0 0
        %481 = vmatpush2.bf16.msra.mxu0 0
        %482 = vmatprep.subr.bf16.mxu0 0
        %483 = vmatpush2.bf16.msra.mxu0 0
        %484 = vmatprep.subr.bf16.mxu0 0
        %485 = vmatpush2.bf16.msra.mxu0 0
        %486 = vmatprep.subr.bf16.mxu0 0
        %487 = vmatpush2.bf16.msra.mxu0 0
        %488 = vmatprep.subr.bf16.mxu0 0
        %489 = vmatpush2.bf16.msra.mxu0 0
        %490 = vmatprep.subr.bf16.mxu0 0
        %491 = vmatpush2.bf16.msra.mxu0 0
        %492 = vmatprep.subr.bf16.mxu0 0
        %493 = vmatpush2.bf16.msra.mxu0 0
        %494 = vmatprep.mubr.bf16.mxu0 0
        %495 = vmatmul.mubr.bf16.gmra.mxu0 %v409
        %v496 = vpop.f32.mrf.mxu0
        %v497 = vadd.f32 0.0, %v496
        %v498 = vpop.f32.mrf.mxu0
        %v499 = vpop.f32.mrf.mxu0
        %v500 = vpop.f32.mrf.mxu0
        %501 = vdwg.mxu0
        %503 = vset.pattern.permute.xlu0 0
        %504 = vperm.xlu0 %503, %v223
        %v505 = vpop.permute.xlu0 %504
        %v507 = vmul.f32 %v456, %v505
        %v508 = vmul.f32 %v458, %v505
        %v509 = vmul.f32 %v497, %v505
        %510 = vset.pattern.permute.xlu0 1
        %511 = vperm.xlu0 %510, %v223
        %v512 = vpop.permute.xlu0 %511
        %v514 = vadd.f32 %v507, %v512
        %v515 = vadd.f32 %v508, %v512
        %v516 = vadd.f32 %v509, %v512
        %v517 = vmax.f32 %v514, 0.0
        %v518 = vmax.f32 %v515, 0.0
        %v519 = vmax.f32 %v516, 0.0
        %v520 = vsel %vm276, %v517, 0.0
        %v521 = vsel %vm277, %v518, 0.0
        %v522 = vsel %vm278, %v519, 0.0
        %526 = vrot.lane.b32.xlu0 %v520, 19
        %v527 = vpop.permute.xlu0 %526
        %528 = vrot.lane.b32.xlu0 %v521, 19
        %v529 = vpop.permute.xlu0 %528
        %530 = vrot.lane.b32.xlu0 %v522, 19
        %v531 = vpop.permute.xlu0 %530
        %vm532 = vcmask 154624
        %v533 = vsel %vm532, %v527, %v529
        %v534 = vsel %vm532, %v529, %v531
        %v538 = vsel %vm532, 0.0, %v527
        %vm539 = vcmask 416768
        %v540 = vsel %vm539, %v534, 0.0
        %543 = vrot.lane.b32.xlu0 %v538, 127
        %v544 = vpop.permute.xlu0 %543
        %545 = vrot.lane.b32.xlu0 %v533, 127
        %v546 = vpop.permute.xlu0 %545
        %547 = vrot.lane.b32.xlu0 %v540, 127
        %v548 = vpop.permute.xlu0 %547
        %v549 = vsel %vm294, %v544, %v546
        %v550 = vsel %vm294, %v546, %v548
        %554 = vrot.lane.b32.xlu0 %v538, 126
        %v555 = vpop.permute.xlu0 %554
        %556 = vrot.lane.b32.xlu0 %v533, 126
        %v557 = vpop.permute.xlu0 %556
        %558 = vrot.lane.b32.xlu0 %v540, 126
        %v559 = vpop.permute.xlu0 %558
        %v560 = vsel %vm306, %v555, %v557
        %v561 = vsel %vm306, %v557, %v559
        %565 = vrot.lane.b32.xlu0 %v538, 110
        %v566 = vpop.permute.xlu0 %565
        %567 = vrot.lane.b32.xlu0 %v533, 110
        %v568 = vpop.permute.xlu0 %567
        %569 = vrot.lane.b32.xlu0 %v540, 110
        %v570 = vpop.permute.xlu0 %569
        %v571 = vsel %vm318, %v566, %v568
        %v572 = vsel %vm318, %v568, %v570
        %576 = vrot.lane.b32.xlu0 %v538, 109
        %v577 = vpop.permute.xlu0 %576
        %578 = vrot.lane.b32.xlu0 %v533, 109
        %v579 = vpop.permute.xlu0 %578
        %580 = vrot.lane.b32.xlu0 %v540, 109
        %v581 = vpop.permute.xlu0 %580
        %v582 = vsel %vm330, %v577, %v579
        %v583 = vsel %vm330, %v579, %v581
        %587 = vrot.lane.b32.xlu0 %v538, 108
        %v588 = vpop.permute.xlu0 %587
        %589 = vrot.lane.b32.xlu0 %v533, 108
        %v590 = vpop.permute.xlu0 %589
        %591 = vrot.lane.b32.xlu0 %v540, 108
        %v592 = vpop.permute.xlu0 %591
        %v593 = vsel %vm342, %v588, %v590
        %v594 = vsel %vm342, %v590, %v592
        %598 = vrot.lane.b32.xlu0 %v538, 92
        %v599 = vpop.permute.xlu0 %598
        %600 = vrot.lane.b32.xlu0 %v533, 92
        %v601 = vpop.permute.xlu0 %600
        %602 = vrot.lane.b32.xlu0 %v540, 92
        %v603 = vpop.permute.xlu0 %602
        %v604 = vsel %vm354, %v599, %v601
        %v605 = vsel %vm354, %v601, %v603
        %609 = vrot.lane.b32.xlu0 %v538, 91
        %v610 = vpop.permute.xlu0 %609
        %611 = vrot.lane.b32.xlu0 %v533, 91
        %v612 = vpop.permute.xlu0 %611
        %613 = vrot.lane.b32.xlu0 %v540, 91
        %v614 = vpop.permute.xlu0 %613
        %v615 = vsel %vm366, %v610, %v612
        %v616 = vsel %vm366, %v612, %v614
        %620 = vrot.lane.b32.xlu0 %v538, 90
        %v621 = vpop.permute.xlu0 %620
        %622 = vrot.lane.b32.xlu0 %v533, 90
        %v623 = vpop.permute.xlu0 %622
        %624 = vrot.lane.b32.xlu0 %v540, 90
        %v625 = vpop.permute.xlu0 %624
        %v626 = vsel %vm378, %v621, %v623
        %v627 = vsel %vm378, %v623, %v625
        %v631 = vpack.c.bf16 %v549, %v538
        %v632 = vpack.c.bf16 %v550, %v533
        %v633 = vpack.c.bf16 %v548, %v540
        %v634 = vpack.c.bf16 %v571, %v560
        %v635 = vpack.c.bf16 %v572, %v561
        %v636 = vpack.c.bf16 %v570, %v559
        %v637 = vpack.c.bf16 %v593, %v582
        %v638 = vpack.c.bf16 %v594, %v583
        %v639 = vpack.c.bf16 %v592, %v581
        %v640 = vpack.c.bf16 %v615, %v604
        %v641 = vpack.c.bf16 %v616, %v605
        %v642 = vpack.c.bf16 %v614, %v603
        %v643 = vpack.c.bf16 %v626, %v626
        %v644 = vpack.c.bf16 %v627, %v627
        %v645 = vpack.c.bf16 %v625, %v625
        %v646 = vld [vmem:[#allocation5] sm:$0xf]
        %vm647 = vcmask 588800
        %v649 = vsel %vm647, %v646, 0
        %v652 = vsel %vm384, %v643, 0
        %v655 = vsel %vm384, %v644, 0
        %v658 = vsel %vm384, %v645, 0
        %660 = vmatprep.subr.bf16.mxu0 0
        %661 = vmatpush1.bf16.msra.mxu0 0
        %662 = vmatprep.subr.bf16.mxu0 0
        %663 = vmatpush1.bf16.msra.mxu0 0
        %664 = vmatprep.subr.bf16.mxu0 0
        %665 = vmatpush1.bf16.msra.mxu0 0
        %666 = vmatprep.subr.bf16.mxu0 %v655
        %667 = vmatpush1.bf16.msra.mxu0 %v652
        %668 = vmatprep.subr.bf16.mxu0 %v641
        %669 = vmatpush1.bf16.msra.mxu0 %v640
        %670 = vmatprep.subr.bf16.mxu0 %v638
        %671 = vmatpush1.bf16.msra.mxu0 %v637
        %672 = vmatprep.subr.bf16.mxu0 %v635
        %673 = vmatpush1.bf16.msra.mxu0 %v634
        %674 = vmatprep.subr.bf16.mxu0 %v632
        %675 = vmatpush1.bf16.msra.mxu0 %v631
        %676 = vmatprep.subr.bf16.mxu0 0
        %677 = vmatpush2.bf16.msra.mxu0 0
        %678 = vmatprep.subr.bf16.mxu0 0
        %679 = vmatpush2.bf16.msra.mxu0 0
        %680 = vmatprep.subr.bf16.mxu0 0
        %681 = vmatpush2.bf16.msra.mxu0 0
        %682 = vmatprep.subr.bf16.mxu0 0
        %683 = vmatpush2.bf16.msra.mxu0 0
        %684 = vmatprep.subr.bf16.mxu0 0
        %685 = vmatpush2.bf16.msra.mxu0 0
        %686 = vmatprep.subr.bf16.mxu0 0
        %687 = vmatpush2.bf16.msra.mxu0 0
        %688 = vmatprep.subr.bf16.mxu0 0
        %689 = vmatpush2.bf16.msra.mxu0 0
        %690 = vmatprep.subr.bf16.mxu0 0
        %691 = vmatpush2.bf16.msra.mxu0 0
        %692 = vmatprep.mubr.bf16.mxu0 0
        %693 = vmatmul.mubr.bf16.gmra.mxu0 %v649
        %v694 = vpop.f32.mrf.mxu0
        %v695 = vadd.f32 0.0, %v694
        %v696 = vpop.f32.mrf.mxu0
        %v697 = vadd.f32 0.0, %v696
        %v698 = vpop.f32.mrf.mxu0
        %v699 = vpop.f32.mrf.mxu0
        %700 = vdwg.mxu0
        %701 = vmatprep.subr.bf16.mxu0 0
        %702 = vmatpush1.bf16.msra.mxu0 0
        %703 = vmatprep.subr.bf16.mxu0 0
        %704 = vmatpush1.bf16.msra.mxu0 0
        %705 = vmatprep.subr.bf16.mxu0 0
        %706 = vmatpush1.bf16.msra.mxu0 0
        %707 = vmatprep.subr.bf16.mxu0 0
        %708 = vmatpush1.bf16.msra.mxu0 %v658
        %709 = vmatprep.subr.bf16.mxu0 0
        %710 = vmatpush1.bf16.msra.mxu0 %v642
        %711 = vmatprep.subr.bf16.mxu0 0
        %712 = vmatpush1.bf16.msra.mxu0 %v639
        %713 = vmatprep.subr.bf16.mxu0 0
        %714 = vmatpush1.bf16.msra.mxu0 %v636
        %715 = vmatprep.subr.bf16.mxu0 0
        %716 = vmatpush1.bf16.msra.mxu0 %v633
        %717 = vmatprep.subr.bf16.mxu0 0
        %718 = vmatpush2.bf16.msra.mxu0 0
        %719 = vmatprep.subr.bf16.mxu0 0
        %720 = vmatpush2.bf16.msra.mxu0 0
        %721 = vmatprep.subr.bf16.mxu0 0
        %722 = vmatpush2.bf16.msra.mxu0 0
        %723 = vmatprep.subr.bf16.mxu0 0
        %724 = vmatpush2.bf16.msra.mxu0 0
        %725 = vmatprep.subr.bf16.mxu0 0
        %726 = vmatpush2.bf16.msra.mxu0 0
        %727 = vmatprep.subr.bf16.mxu0 0
        %728 = vmatpush2.bf16.msra.mxu0 0
        %729 = vmatprep.subr.bf16.mxu0 0
        %730 = vmatpush2.bf16.msra.mxu0 0
        %731 = vmatprep.subr.bf16.mxu0 0
        %732 = vmatpush2.bf16.msra.mxu0 0
        %733 = vmatprep.mubr.bf16.mxu0 0
        %734 = vmatmul.mubr.bf16.gmra.mxu0 %v649
        %v735 = vpop.f32.mrf.mxu0
        %v736 = vadd.f32 0.0, %v735
        %v737 = vpop.f32.mrf.mxu0
        %v738 = vpop.f32.mrf.mxu0
        %v739 = vpop.f32.mrf.mxu0
        %740 = vdwg.mxu0
        %741 = vset.pattern.permute.xlu0 2
        %742 = vperm.xlu0 %741, %v223
        %v743 = vpop.permute.xlu0 %742
        %v745 = vmul.f32 %v695, %v743
        %v746 = vmul.f32 %v697, %v743
        %v747 = vmul.f32 %v736, %v743
        %748 = vset.pattern.permute.xlu0 3
        %749 = vperm.xlu0 %748, %v223
        %v750 = vpop.permute.xlu0 %749
        %v752 = vadd.f32 %v745, %v750
        %v753 = vadd.f32 %v746, %v750
        %v754 = vadd.f32 %v747, %v750
        %v755 = vrot.slane %v280, 6
        %v756 = vrot.slane %v284, 6
        %v757 = vrot.slane %v281, 6
        %758 = vrot.lane.b32.xlu0 %v755, 109
        %v759 = vpop.permute.xlu0 %758
        %760 = vrot.lane.b32.xlu0 %v756, 109
        %v761 = vpop.permute.xlu0 %760
        %762 = vrot.lane.b32.xlu0 %v757, 109
        %v763 = vpop.permute.xlu0 %762
        %v764 = vsel %vm330, %v759, %v761
        %v765 = vsel %vm330, %v761, %v763
        %v769 = vsel %vm411, 0.0, %v764
        %v770 = vsel %vm411, 0.0, %v765
        %v771 = vsel %vm411, 0.0, %v763
        %vm772 = vcmask 1045504
        %v773 = vsel %vm772, %v769, 0.0
        %v774 = vsel %vm772, %v770, 0.0
        %v775 = vsel %vm772, %v771, 0.0
        %v776 = vadd.f32 %v752, %v773
        %v777 = vadd.f32 %v753, %v774
        %v778 = vadd.f32 %v754, %v775
        %v779 = vmax.f32 %v776, 0.0
        %v780 = vmax.f32 %v777, 0.0
        %v781 = vmax.f32 %v778, 0.0
        %782 = vst [vmem:[%s216] sm:$0xff] %v779
        %783 = vst [vmem:[%s216 + $0x8] sm:$0xff] %v780
        %vm784 = vcmask 261120
        %785 = vst.msk [vmem:[%s216 + $0x10] sm:$0xff] %vm784, %v781
        %s786 = sand.u32 %s117, 1
        %s787 = scalar_lea.sflag [#allocation4], %s786
        %s788 = sand.u32 %s117, 1
        %s789 = smul.addr %s788, 24
        %s790 = scalar_lea.vmem [#allocation7], %s789
        // Predicated region
        $region45: #{tpu_custom_call.1} parent=35 // pred_check
          %p791 = pneg %p127
        $region46: #{tpu_custom_call.1} parent=35 // pred_check_branch
          %793 = sbr.rel (%p791) target = $region48
        $region47: #{tpu_custom_call.1} parent=35 // pred_region
          %s795 = ssub.s32 384, 384
          %796 = vsyncadd %s787, %s795
          %s797 = smul.addr %s20, 3
          %s798 = smul.addr %s797, 128
          %s799 = scalar_lea.hbm %s4, %s798
          %s801 = sshll.u32 %s790, 4
          %s802 = int_to_ptr.vmem [resolvable:$true] %s801
          %804 = dma.vmem_to_hbm [thread:$0]  %s802, 384, %s799, %s787
        $region48: #{tpu_custom_call.1} parent=35 // pred_fallthru
          _
      $region36: #{tpu_custom_call.1} parent=5 // pred_fallthru
        _
      %p805 = scmp.le.s32.totalorder 2, %s15
      // Predicated region
      $region49: #{tpu_custom_call.1} parent=5 // pred_check
        %p806 = pneg %p805
      $region50: #{tpu_custom_call.1} parent=5 // pred_check_branch
        %808 = sbr.rel (%p806) target = $region52
      $region51: #{tpu_custom_call.1} parent=5 // pred_region
        %s809 = ssub.s32 %s15, 2
        // Predicated region
        $region53: #{tpu_custom_call.1} parent=51 // pred_check
          %p810 = pneg %p133
        $region54: #{tpu_custom_call.1} parent=51 // pred_check_branch
          %812 = sbr.rel (%p810) target = $region56
        $region55: #{tpu_custom_call.1} parent=51 // pred_region
          %s813 = sand.u32 %s118, 1
          %s814 = scalar_lea.sflag [#allocation4], %s813
          %s815 = sand.u32 %s118, 1
          %s816 = smul.addr %s815, 24
          %s817 = scalar_lea.vmem [#allocation7], %s816
          %818 = dma.done %s814, 384
        $region56: #{tpu_custom_call.1} parent=51 // pred_fallthru
          _
      $region52: #{tpu_custom_call.1} parent=5 // pred_fallthru
        _
    $region6: #{tpu_custom_call.1} parent=1 // loop_footer
      %s19 = sadd.s32 1, %s15
    $region7: #{tpu_custom_call.1} parent=1 // loop_footer_branch
      %14 = sbr.rel target = $region3
    $region8: #{tpu_custom_call.1} parent=1 // loop_exit
      _
    %819 = vsyncpa [#allocation3], 1
    %s820 = scalar_lea.sflag [#allocation3], 1
    %821 = vsyncpa %s820, 1
    %822 = vsyncpa [#allocation6], 1
    %823 = vsyncpa [#allocation4], 1
    %s824 = scalar_lea.sflag [#allocation4], 1
    %825 = vsyncpa %s824, 1

</llo_original>
